<compile_context>
chip_gen: v7x
topology: tpu7x:2x2x1
jax: 0.10.0
libtpu: 0.0.40
codegen_flags: <defaults>
</compile_context>

<pallas_src>
import functools

import jax
import jax.numpy as jnp
from jax import lax
from jax.experimental import pallas as pl
from jax.experimental.pallas import tpu as pltpu


def _round_up(x, m):
    return (x + m - 1) // m * m


def _head_kernel(seed_ref, x_ref, w_ref, b_ref, o_ref, *,
                 dropout_p, training, block_rows):
    x = x_ref[...]                                   # [TB, Cin_p]  bf16

    if training and dropout_p > 0.0:
        tb, cp = x.shape
        # Unique counter per (global row, column); independent of the tiling.
        row = lax.broadcasted_iota(jnp.uint32, (tb, cp), 0)
        col = lax.broadcasted_iota(jnp.uint32, (tb, cp), 1)
        g_row = pl.program_id(0).astype(jnp.uint32) * jnp.uint32(block_rows) + row
        h = g_row * jnp.uint32(cp) + col
        h = h + seed_ref[0].astype(jnp.uint32) * jnp.uint32(0x9E3779B9)
        # splitmix32-style mixer (pure VPU integer ops).
        h = (h ^ (h >> 16)) * jnp.uint32(0x7FEB352D)
        h = (h ^ (h >> 15)) * jnp.uint32(0x846CA68B)
        h = h ^ (h >> 16)
        # Exact keep probability via integer threshold; the 1/(1-p) rescale is
        # pre-folded into the weight, so dropped elements are just zeroed.
        thresh = jnp.uint32(min(int(round(dropout_p * (1 << 32))), (1 << 32) - 1))
        x = jnp.where(h >= thresh, x, jnp.zeros_like(x))

    # fc_cls: [TB, Cin_p] @ [Cin_p, N_p] on the MXU, f32 accumulation, + bias.
    o_ref[...] = (
        jnp.dot(x, w_ref[...], preferred_element_type=jnp.float32) + b_ref[...]
    )


def single_mode_head(x_img, weight, bias, seed, *,
                     dropout_p=0.8, training=True, block_rows=None):
    """Forward of Single_Mode_Head.

    x_img:  [B, in_channels]              (any float dtype)
    weight: [num_classes, in_channels]    (nn.Linear layout)
    bias:   [num_classes]
    """
    assert 0.0 <= dropout_p < 1.0
    B, cin = x_img.shape
    n_cls, cin_w = weight.shape
    assert cin_w == cin

    # Lane-dense padding: feature (contraction) dim and class (output lane) dim
    # padded to multiples of 128 so loads/stores are unmasked and MXU tiles full.
    cin_p = _round_up(cin, 128)
    n_p = _round_up(n_cls, 128)

    # Batch tile: big enough to amortize per-step overhead, small enough that
    # double-buffered x/out tiles stay well under v7x's 32 MiB scoped VMEM.
    if block_rows is None:
        block_rows = 512 if B >= 512 else _round_up(B, 8)
    b_p = _round_up(B, block_rows)

    # bf16 MXU operands (f32 accumulation). NOTE: small precision deviation from
    # PyTorch's `.float()` matmul; accumulation stays f32.
    x_p = (jnp.zeros((b_p, cin_p), jnp.bfloat16)
           .at[:B, :cin].set(x_img.astype(jnp.bfloat16)))
    w_t = weight.astype(jnp.float32).T                       # [cin, n_cls]
    if training and dropout_p > 0.0:
        w_t = w_t * jnp.float32(1.0 / (1.0 - dropout_p))     # fold dropout rescale
    w_p = (jnp.zeros((cin_p, n_p), jnp.bfloat16)
           .at[:cin, :n_cls].set(w_t.astype(jnp.bfloat16)))
    b_2d = (jnp.zeros((1, n_p), jnp.float32)
            .at[0, :n_cls].set(bias.astype(jnp.float32)))

    seed_arr = jnp.asarray([seed], dtype=jnp.int32)
    grid = (b_p // block_rows,)

    kernel = functools.partial(
        _head_kernel,
        dropout_p=float(dropout_p),
        training=bool(training),
        block_rows=int(block_rows),
    )

    flops = 2 * b_p * cin_p * n_p
    bytes_accessed = (x_p.size * 2 + w_p.size * 2 + b_2d.size * 4 + b_p * n_p * 4)

    out = pl.pallas_call(
        kernel,
        out_shape=jax.ShapeDtypeStruct((b_p, n_p), jnp.float32),
        grid_spec=pltpu.PrefetchScalarGridSpec(
            num_scalar_prefetch=1,                 # seed -> SMEM
            grid=grid,
            in_specs=[
                pl.BlockSpec((block_rows, cin_p), lambda i, seed: (i, 0)),  # x stream
                pl.BlockSpec((cin_p, n_p), lambda i, seed: (0, 0)),         # W resident
                pl.BlockSpec((1, n_p), lambda i, seed: (0, 0)),             # bias resident
            ],
            out_specs=pl.BlockSpec((block_rows, n_p), lambda i, seed: (i, 0)),
        ),
        compiler_params=pltpu.CompilerParams(
            dimension_semantics=("parallel",),     # lets 2-TC chips split the batch
        ),
        cost_estimate=pl.CostEstimate(
            flops=flops, transcendentals=0, bytes_accessed=bytes_accessed),
    )(seed_arr, x_p, w_p, b_2d)

    return out[:B, :n_cls]


if __name__ == "__main__":
    # Small shapes consistent with the module's forward: [batch, in_channels].
    B, IN_CHANNELS, NUM_CLASSES = 8, 32, 16

    key = jax.random.PRNGKey(0)
    kx, kw, kb = jax.random.split(key, 3)

    # nn.Linear(in_channels, num_classes): weight [N, Cin], bias [N].
    weight = 0.01 * jax.random.normal(kw, (NUM_CLASSES, IN_CHANNELS), jnp.float32)
    bias = 0.01 * jax.random.normal(kb, (NUM_CLASSES,), jnp.float32)

    # Non-f32 input to exercise the cast path of the original forward.
    x_img = jax.random.normal(kx, (B, IN_CHANNELS), jnp.bfloat16)

    # Training mode (dropout active).
    out_train = jax.block_until_ready(
        single_mode_head(x_img, weight, bias, seed=0, dropout_p=0.8, training=True))
    assert out_train.shape == (B, NUM_CLASSES) and out_train.dtype == jnp.float32
    assert bool(jnp.all(jnp.isfinite(out_train)))

    # Eval mode (dropout disabled) must equal a plain linear layer.
    out_eval = jax.block_until_ready(
        single_mode_head(x_img, weight, bias, seed=0, dropout_p=0.8, training=False))
    ref_eval = (x_img.astype(jnp.float32)
                @ weight.astype(jnp.bfloat16).astype(jnp.float32).T
                + bias[None, :])
    assert jnp.allclose(out_eval, ref_eval, atol=1e-5, rtol=1e-4)

    print("KERNEL_OK")
</pallas_src>

<mosaic_0001>
module attributes {stable_mosaic.version = 11 : i64} {
  func.func @_head_kernel(%arg0: i32, %arg1: memref<1xi32, #tpu.memory_space<smem>>, %arg2: memref<8x128xbf16, #tpu.memory_space<vmem>>, %arg3: memref<128x128xbf16, #tpu.memory_space<vmem>>, %arg4: memref<1x128xf32, #tpu.memory_space<vmem>>, %arg5: memref<8x128xf32, #tpu.memory_space<vmem>>) attributes {dimension_semantics = [#tpu.dimension_semantics<parallel>], iteration_bounds = array<i64: 1>, scalar_prefetch = 1 : i64, scratch_operands = 0 : i64, tpu.core_type = #tpu.core_type<tc>, window_params = [{transform_indices = @transform_0, window_bounds = array<i64: 8, 128>}, {pipeline_mode = #tpu.pipeline_mode<synchronous>, transform_indices = @transform_1, window_bounds = array<i64: 128, 128>}, {pipeline_mode = #tpu.pipeline_mode<synchronous>, transform_indices = @transform_2, window_bounds = array<i64: 1, 128>}, {transform_indices = @transform_3, window_bounds = array<i64: 8, 128>}]} {
    %c0 = arith.constant 0 : index
    %c0_0 = arith.constant 0 : index
    %0 = vector.load %arg2[%c0, %c0_0] : memref<8x128xbf16, #tpu.memory_space<vmem>>, vector<8x128xbf16>
    %1 = tpu.iota {dimensions = array<i32: 0>} : vector<8x128xi32>
    %2 = tpu.iota {dimensions = array<i32: 1>} : vector<8x128xi32>
    %c8_i32 = arith.constant 8 : i32
    %3 = arith.muli %arg0, %c8_i32 : i32
    %4 = vector.broadcast %3 : i32 to vector<8x128xi32>
    %5 = arith.addi %4, %1 : vector<8x128xi32>
    %c128_i32 = arith.constant 128 : i32
    %6 = vector.broadcast %c128_i32 : i32 to vector<8x128xi32>
    %7 = arith.muli %5, %6 : vector<8x128xi32>
    %8 = arith.addi %7, %2 : vector<8x128xi32>
    %c0_1 = arith.constant 0 : index
    %9 = memref.load %arg1[%c0_1] : memref<1xi32, #tpu.memory_space<smem>>
    %c-1640531527_i32 = arith.constant -1640531527 : i32
    %10 = arith.muli %9, %c-1640531527_i32 : i32
    %11 = vector.broadcast %10 : i32 to vector<8x128xi32>
    %12 = arith.addi %8, %11 : vector<8x128xi32>
    %c16_i32 = arith.constant 16 : i32
    %13 = vector.broadcast %c16_i32 : i32 to vector<8x128xi32>
    %14 = arith.shrui %12, %13 : vector<8x128xi32>
    %15 = arith.xori %12, %14 : vector<8x128xi32>
    %c2146121005_i32 = arith.constant 2146121005 : i32
    %16 = vector.broadcast %c2146121005_i32 : i32 to vector<8x128xi32>
    %17 = arith.muli %15, %16 : vector<8x128xi32>
    %c15_i32 = arith.constant 15 : i32
    %18 = vector.broadcast %c15_i32 : i32 to vector<8x128xi32>
    %19 = arith.shrui %17, %18 : vector<8x128xi32>
    %20 = arith.xori %17, %19 : vector<8x128xi32>
    %c-2073254261_i32 = arith.constant -2073254261 : i32
    %21 = vector.broadcast %c-2073254261_i32 : i32 to vector<8x128xi32>
    %22 = arith.muli %20, %21 : vector<8x128xi32>
    %c16_i32_2 = arith.constant 16 : i32
    %23 = vector.broadcast %c16_i32_2 : i32 to vector<8x128xi32>
    %24 = arith.shrui %22, %23 : vector<8x128xi32>
    %25 = arith.xori %22, %24 : vector<8x128xi32>
    %c-858993459_i32 = arith.constant -858993459 : i32
    %26 = vector.broadcast %c-858993459_i32 : i32 to vector<8x128xi32>
    %27 = arith.cmpi uge, %25, %26 : vector<8x128xi32>
    %cst = arith.constant 0.000000e+00 : bf16
    %28 = vector.broadcast %cst : bf16 to vector<8x128xbf16>
    %29 = arith.select %27, %0, %28 : vector<8x128xi1>, vector<8x128xbf16>
    %c0_3 = arith.constant 0 : index
    %c0_4 = arith.constant 0 : index
    %30 = vector.load %arg3[%c0_3, %c0_4] : memref<128x128xbf16, #tpu.memory_space<vmem>>, vector<128x128xbf16>
    %cst_5 = arith.constant dense<0.000000e+00> : vector<8x128xf32>
    %31 = tpu.matmul %29, %30, %cst_5 {dimension_numbers = #tpu.dot_dimension_numbers<[1], [0], [0], [1], [0, 0, 1, 1], [], []>} : vector<8x128xbf16>, vector<128x128xbf16>, vector<8x128xf32> -> vector<8x128xf32>
    %c0_6 = arith.constant 0 : index
    %c0_7 = arith.constant 0 : index
    %32 = vector.load %arg4[%c0_6, %c0_7] : memref<1x128xf32, #tpu.memory_space<vmem>>, vector<1x128xf32>
    %33 = vector.broadcast %32 : vector<1x128xf32> to vector<8x128xf32>
    %34 = arith.addf %31, %33 : vector<8x128xf32>
    %c0_8 = arith.constant 0 : index
    %c0_9 = arith.constant 0 : index
    %35 = vector.load %arg5[%c0_8, %c0_9] : memref<8x128xf32, #tpu.memory_space<vmem>>, vector<8x128xf32>
    tpu.vector_store %arg5[%c0_8, %c0_9], %34 {strides = array<i32>} : memref<8x128xf32, #tpu.memory_space<vmem>>, vector<8x128xf32>,
    return
  }
  func.func @transform_0(%arg0: i32, %arg1: memref<1xi32, #tpu.memory_space<smem>>) -> (i32, i32) {
    %c0_i32 = arith.constant 0 : i32
    %c0_i32_0 = arith.constant 0 : i32
    return %arg0, %c0_i32 : i32, i32
  }
  func.func @transform_1(%arg0: i32, %arg1: memref<1xi32, #tpu.memory_space<smem>>) -> (i32, i32) {
    %c0_i32 = arith.constant 0 : i32
    %c0_i32_0 = arith.constant 0 : i32
    %c0_i32_1 = arith.constant 0 : i32
    return %c0_i32, %c0_i32_0 : i32, i32
  }
  func.func @transform_2(%arg0: i32, %arg1: memref<1xi32, #tpu.memory_space<smem>>) -> (i32, i32) {
    %c0_i32 = arith.constant 0 : i32
    %c0_i32_0 = arith.constant 0 : i32
    %c0_i32_1 = arith.constant 0 : i32
    return %c0_i32, %c0_i32_0 : i32, i32
  }
  func.func @transform_3(%arg0: i32, %arg1: memref<1xi32, #tpu.memory_space<smem>>) -> (i32, i32) {
    %c0_i32 = arith.constant 0 : i32
    %c0_i32_0 = arith.constant 0 : i32
    return %arg0, %c0_i32 : i32, i32
  }
}

</mosaic_0001>

<llo_original>
// kernel: tpu_custom_call.1
$region0: #{tpu_custom_call.1}
  #allocation0 [shape = 'u32[]', space=smem, size = 0x4, offset = 0x4, fixed_abs, tag = 'smem constant byte address 0x4 - core index']
  #allocation1 [shape = 'u32[144,128]{1,0:T(1,128)}', space=vmem, size = 0x12000, scoped, tag = 'internal scratch']
  #allocation2 [shape = 's32[1]{0}', space=sflag, size = 0x4, scoped, tag = 'scoped memory for tpu_custom_call.1']
  #allocation3 [shape = 's32[1]{0:T(128)S(6)}', space=smem, size = 0x200, scoped, tag = 'prefetched SMEM operand 0']
  %s0 = inlined_call_operand.<no memory space> [shape: s32[1], index: 0, kind: input, shape index: {}]
  %s1 = inlined_call_operand.hbm [shape: bf16[8,128], index: 1, kind: input, shape index: {}]
  %s2 = inlined_call_operand.hbm [shape: bf16[128,128], index: 2, kind: input, shape index: {}]
  %s3 = inlined_call_operand.vmem [shape: f32[1,128], index: 3, kind: input, shape index: {}]
  %s4 = inlined_call_operand.hbm [shape: f32[8,128], index: 4, kind: output, shape index: {}]
  %s5 = sld [smem:[#allocation0]]
  $region30: #{tpu_custom_call.1} parent=0
    _
  %s7 = ssub.s32 1, %s5
  %s8 = scalar_select 0, %s7, %s5
  %9 = sst [smem:[#allocation3]] %s0
  $region1: #{tpu_custom_call.1} parent=0
    #allocation4 [shape = 'u8[2048]{0}', space=vmem, size = 0x800, scoped, tag = 'input window, operand 1, single buffered']
    #allocation5 [shape = 's32[1]{0}', space=sflag, size = 0x4, scoped, tag = 'scoped memory for tpu_custom_call.1']
    #allocation6 [shape = 's32[1]{0}', space=sflag, size = 0x4, scoped, tag = 'scoped memory for tpu_custom_call.1']
    #allocation7 [shape = 'u8[32768]{0}', space=vmem, size = 0x8000, scoped, tag = 'input window, operand 2, single buffered']
    #allocation8 [shape = 's32[1]{0}', space=sflag, size = 0x4, scoped, tag = 'scoped memory for tpu_custom_call.1']
    #allocation9 [shape = 'u8[4096]{0}', space=vmem, size = 0x1000, scoped, tag = 'output window, operand 0, single buffered']
    %10 = vsyncpa [#allocation5], 0
    %11 = vsyncpa [#allocation8], 0
    %12 = vsyncpa [#allocation6], 0
    // Predicated region
    $region2: #{tpu_custom_call.1} parent=1 // pred_check
      _
    $region3: #{tpu_custom_call.1} parent=1 // pred_check_branch
      %14 = sbr.rel (0) target = $region5
    $region4: #{tpu_custom_call.1} parent=1 // pred_region
      %s16 = ssub.s32 64, 64
      %17 = vsyncadd [#allocation5], %s16
      %s19 = sshll.u32 [#allocation4], 4
      %s20 = int_to_ptr.vmem [resolvable:$true] %s19
      %22 = dma.hbm_to_vmem [thread:$0]  %s1, 64, %s20, [#allocation5]
    $region5: #{tpu_custom_call.1} parent=1 // pred_fallthru
      _
    // Predicated region
    $region6: #{tpu_custom_call.1} parent=1 // pred_check
      _
    $region7: #{tpu_custom_call.1} parent=1 // pred_check_branch
      %24 = sbr.rel (0) target = $region9
    $region8: #{tpu_custom_call.1} parent=1 // pred_region
      %s26 = ssub.s32 1024, 1024
      %27 = vsyncadd [#allocation8], %s26
      %s28 = sshll.u32 [#allocation7], 4
      %s29 = int_to_ptr.vmem [resolvable:$true] %s28
      %34 = dma.hbm_to_vmem [thread:$0]  %s2, 1024, %s29, [#allocation8], 64, 64, 4
    $region9: #{tpu_custom_call.1} parent=1 // pred_fallthru
      _
    // Predicated region
    $region10: #{tpu_custom_call.1} parent=1 // pred_check
      _
    $region11: #{tpu_custom_call.1} parent=1 // pred_check_branch
      %36 = sbr.rel (0) target = $region13
    $region12: #{tpu_custom_call.1} parent=1 // pred_region
      _
    $region13: #{tpu_custom_call.1} parent=1 // pred_fallthru
      _
    // Predicated region
    $region14: #{tpu_custom_call.1} parent=1 // pred_check
      _
    $region15: #{tpu_custom_call.1} parent=1 // pred_check_branch
      %38 = sbr.rel (0) target = $region17
    $region16: #{tpu_custom_call.1} parent=1 // pred_region
      %39 = dma.done [#allocation5], 64
    $region17: #{tpu_custom_call.1} parent=1 // pred_fallthru
      _
    // Predicated region
    $region18: #{tpu_custom_call.1} parent=1 // pred_check
      _
    $region19: #{tpu_custom_call.1} parent=1 // pred_check_branch
      %41 = sbr.rel (0) target = $region21
    $region20: #{tpu_custom_call.1} parent=1 // pred_region
      %42 = dma.done [#allocation8], 1024
    $region21: #{tpu_custom_call.1} parent=1 // pred_fallthru
      _
    %v44 = vld [vmem:[#allocation4] sm:$0xf]
    %v45 = vlaneseq
    %v46 = vshrl.u32 %v45, 7
    %v47 = vlaneseq
    %v48 = vand.u32 %v47, 127
    %s49 = smul.u32 0, 8
    %v50 = vstv %s49
    %v51 = vadd.s32 %v50, %v46
    %v52 = vmul.u32 %v51, 128
    %v53 = vadd.s32 %v52, %v48
    %s54 = sld [smem:[#allocation3]]
    %s55 = smul.u32 %s54, 2654435769
    %v56 = vstv %s55
    %v57 = vadd.s32 %v53, %v56
    %v58 = vshrl.u32 %v57, 16
    %v59 = vxor.u32 %v57, %v58
    %v60 = vmul.u32 %v59, 2146121005
    %v61 = vshrl.u32 %v60, 15
    %v62 = vxor.u32 %v60, %v61
    %v63 = vmul.u32 %v62, 2221713035
    %v64 = vshrl.u32 %v63, 16
    %v65 = vxor.u32 %v63, %v64
    %vm66 = vcmp.ge.u32.totalorder %v65, 3435973837
    %vm67 = vmpackc.low %vm66, %vm66
    %v68 = vsel %vm67, %v44, 0
    %v69 = vld [vmem:[#allocation7] sm:$0xf]
    %v70 = vld [vmem:[#allocation7 + $0x4] sm:$0xf]
    %v71 = vld [vmem:[#allocation7 + $0x8] sm:$0xf]
    %v72 = vld [vmem:[#allocation7 + $0xc] sm:$0xf]
    %v73 = vld [vmem:[#allocation7 + $0x10] sm:$0xf]
    %v74 = vld [vmem:[#allocation7 + $0x14] sm:$0xf]
    %v75 = vld [vmem:[#allocation7 + $0x18] sm:$0xf]
    %v76 = vld [vmem:[#allocation7 + $0x1c] sm:$0xf]
    %v77 = vld [vmem:[#allocation7 + $0x20] sm:$0xf]
    %v78 = vld [vmem:[#allocation7 + $0x24] sm:$0xf]
    %v79 = vld [vmem:[#allocation7 + $0x28] sm:$0xf]
    %v80 = vld [vmem:[#allocation7 + $0x2c] sm:$0xf]
    %v81 = vld [vmem:[#allocation7 + $0x30] sm:$0xf]
    %v82 = vld [vmem:[#allocation7 + $0x34] sm:$0xf]
    %v83 = vld [vmem:[#allocation7 + $0x38] sm:$0xf]
    %v84 = vld [vmem:[#allocation7 + $0x3c] sm:$0xf]
    %v85 = vld [vmem:[%s3] sm:$0x1]
    %v87 = vlaneseq
    %v88 = vshrl.u32 %v87, 7
    %v89 = vsub.s32 0, %v88
    %v90 = vrot.slane %v85, %v89
    %v108 = vunpack.c.l.b16 %v69
    %v109 = vunpack.c.l.b16 %v70
    %v110 = vunpack.c.l.b16 %v71
    %v111 = vunpack.c.l.b16 %v72
    %v112 = vunpack.c.l.b16 %v73
    %v113 = vunpack.c.l.b16 %v74
    %v114 = vunpack.c.l.b16 %v75
    %v115 = vunpack.c.l.b16 %v76
    %v116 = vunpack.c.l.b16 %v77
    %v117 = vunpack.c.l.b16 %v78
    %v118 = vunpack.c.l.b16 %v79
    %v119 = vunpack.c.l.b16 %v80
    %v120 = vunpack.c.l.b16 %v81
    %v121 = vunpack.c.l.b16 %v82
    %v122 = vunpack.c.l.b16 %v83
    %v123 = vunpack.c.l.b16 %v84
    %v124 = vpack.c.b16 %v109, %v108
    %v125 = vpack.c.b16 %v111, %v110
    %v126 = vpack.c.b16 %v113, %v112
    %v127 = vpack.c.b16 %v115, %v114
    %v128 = vpack.c.b16 %v117, %v116
    %v129 = vpack.c.b16 %v119, %v118
    %v130 = vpack.c.b16 %v121, %v120
    %v131 = vpack.c.b16 %v123, %v122
    %140 = vmatprep.subr.bf16.mxu0 0
    %141 = vmatpush1.bf16.msra.mxu0 %v124
    %142 = vmatprep.subr.bf16.mxu0 0
    %143 = vmatpush1.bf16.msra.mxu0 %v125
    %144 = vmatprep.subr.bf16.mxu0 0
    %145 = vmatpush1.bf16.msra.mxu0 %v126
    %146 = vmatprep.subr.bf16.mxu0 0
    %147 = vmatpush1.bf16.msra.mxu0 %v127
    %148 = vmatprep.subr.bf16.mxu0 0
    %149 = vmatpush1.bf16.msra.mxu0 %v128
    %150 = vmatprep.subr.bf16.mxu0 0
    %151 = vmatpush1.bf16.msra.mxu0 %v129
    %152 = vmatprep.subr.bf16.mxu0 0
    %153 = vmatpush1.bf16.msra.mxu0 %v130
    %154 = vmatprep.subr.bf16.mxu0 0
    %155 = vmatpush1.bf16.msra.mxu0 %v131
    %156 = vmatprep.subr.bf16.mxu0 0
    %157 = vmatpush1.bf16.msra.mxu0 0
    %158 = vmatprep.subr.bf16.mxu0 0
    %159 = vmatpush1.bf16.msra.mxu0 0
    %160 = vmatprep.subr.bf16.mxu0 0
    %161 = vmatpush1.bf16.msra.mxu0 0
    %162 = vmatprep.subr.bf16.mxu0 0
    %163 = vmatpush1.bf16.msra.mxu0 0
    %164 = vmatprep.subr.bf16.mxu0 0
    %165 = vmatpush1.bf16.msra.mxu0 0
    %166 = vmatprep.subr.bf16.mxu0 0
    %167 = vmatpush1.bf16.msra.mxu0 0
    %168 = vmatprep.subr.bf16.mxu0 0
    %169 = vmatpush1.bf16.msra.mxu0 0
    %170 = vmatprep.subr.bf16.mxu0 0
    %171 = vmatpush1.bf16.msra.mxu0 0
    %172 = vmatprep.mubr.bf16.mxu0 0
    %173 = vmatmul.mubr.bf16.gmra.mrb[0].mxu0 %v68
    %v174 = vpop.f32.mrb[0].mxu0
    %v175 = vadd.f32 %v90, %v174
    %v176 = vpop.f32.mrb[0].mxu0
    %v177 = vpop.f32.mrb[0].mxu0
    %v178 = vpop.f32.mrb[0].mxu0
    %179 = vdwg.mxu0
    %180 = vst [vmem:[#allocation9] sm:$0xff] %v175
    // Predicated region
    $region22: #{tpu_custom_call.1} parent=1 // pred_check
      _
    $region23: #{tpu_custom_call.1} parent=1 // pred_check_branch
      %182 = sbr.rel (0) target = $region25
    $region24: #{tpu_custom_call.1} parent=1 // pred_region
      %s184 = ssub.s32 128, 128
      %185 = vsyncadd [#allocation6], %s184
      %s187 = sshll.u32 [#allocation9], 4
      %s188 = int_to_ptr.vmem [resolvable:$true] %s187
      %190 = dma.vmem_to_hbm [thread:$0]  %s188, 128, %s4, [#allocation6]
    $region25: #{tpu_custom_call.1} parent=1 // pred_fallthru
      _
    // Predicated region
    $region26: #{tpu_custom_call.1} parent=1 // pred_check
      _
    $region27: #{tpu_custom_call.1} parent=1 // pred_check_branch
      %192 = sbr.rel (0) target = $region29
    $region28: #{tpu_custom_call.1} parent=1 // pred_region
      %193 = dma.done [#allocation6], 128
    $region29: #{tpu_custom_call.1} parent=1 // pred_fallthru
      _
    %194 = vsyncpa [#allocation5], 1
    %195 = vsyncpa [#allocation8], 1
    %196 = vsyncpa [#allocation6], 1

</llo_original>
